<compile_context>
chip_gen: v7x
topology: tpu7x:2x2x1
jax: 0.10.0
libtpu: 0.0.40
codegen_flags: <defaults>
</compile_context>

<pallas_src>
from functools import partial

import jax
import jax.numpy as jnp
from jax.experimental import pallas as pl
from jax.experimental.pallas import tpu as pltpu


def _round_up(x, m):
    return ((x + m - 1) // m) * m


def _cdiv(a, b):
    return (a + b - 1) // b


# ---------------------------------------------------------------------------
# Kernels
# ---------------------------------------------------------------------------

def _ln_grouped_kernel(x_ref, pm_ref, w_ref, b_ref, o_ref, *, eps):
    """Lane-dense LayerNorm: each 128-wide row holds G independent groups of C.

    pm is a (G*C, G*C) block-diagonal matrix with 1/C inside each group block,
    so a single MXU matmul both reduces over the group and broadcasts the
    statistic back across it -- everything stays (tm, 128) lane-dense.
    """
    x = x_ref[...].astype(jnp.float32)                               # (tm, G*C)
    pm = pm_ref[...]                                                 # (G*C, G*C) f32
    w = w_ref[...].astype(jnp.float32)                               # (1, G*C)
    b = b_ref[...].astype(jnp.float32)
    mean = jnp.dot(x, pm, preferred_element_type=jnp.float32)        # per-group mean
    xc = x - mean
    var = jnp.dot(xc * xc, pm, preferred_element_type=jnp.float32)   # two-pass var
    inv = jax.lax.rsqrt(var + eps)                                   # EUP rsqrt
    o_ref[...] = (xc * inv * w + b).astype(o_ref.dtype)
    # TODO(synk): on v5e the two f32 MXU matmuls are roughly at parity with HBM
    # time; if they ever bind, move the group reduce to XLU roll-butterflies.


def _ln_rows_kernel(x_ref, w_ref, b_ref, o_ref, *, eps, inv_c):
    """Fallback: one LayerNorm group per row (arbitrary channel count C)."""
    x = x_ref[...].astype(jnp.float32)                               # (tm, C)
    w = w_ref[...].astype(jnp.float32)
    b = b_ref[...].astype(jnp.float32)
    mean = jnp.sum(x, axis=-1, keepdims=True) * inv_c
    xc = x - mean
    var = jnp.sum(xc * xc, axis=-1, keepdims=True) * inv_c
    inv = jax.lax.rsqrt(var + eps)
    o_ref[...] = (xc * inv * w + b).astype(o_ref.dtype)


# ---------------------------------------------------------------------------
# Wrapper
# ---------------------------------------------------------------------------

@partial(jax.jit, static_argnames=("eps",))
def layernorm_withbias(x, weight, bias, eps=1e-5):
    """WithBias_LayerNorm over the last axis of `x` (any leading shape)."""
    orig_shape = x.shape
    dtype = x.dtype
    C = int(orig_shape[-1])
    M = 1
    for d in orig_shape[:-1]:
        M *= int(d)

    xf = x.reshape(M, C)                       # contiguous reshape (free)
    w2 = weight.reshape(1, C)
    b2 = bias.reshape(1, C)
    itemsize = jnp.dtype(dtype).itemsize

    # Lane-dense packed path: G groups of C packed into one 128-lane row.
    # Requires an exact (free) reshape, i.e. 128 % C == 0 and M % G == 0.
    use_packed = (C <= 128) and (128 % C == 0) and (M % (128 // C) == 0)
    if use_packed:
        G = 128 // C
        Wd = G * C                             # == 128
        Mrows = M // G
        xk = xf.reshape(Mrows, Wd)             # contiguous reshape (free)
        w_k = jnp.tile(w2, (1, G))
        b_k = jnp.tile(b2, (1, G))
    else:
        G, Wd, Mrows = 1, C, M
        xk, w_k, b_k = xf, w2, b2
        # TODO(synk): for C < 128 with 128 % C != 0 a lane-dense packed layout
        # would need a strided repack (extra HBM pass); kept row-wise instead.

    # Width-aware tile: 2x double-buffered (input + output) blocks must fit
    # comfortably under v5e's 16 MiB scoped-VMEM default (v6e/v7x have >= 32).
    vmem_budget = 12 * 1024 * 1024
    per_row_bytes = 2 * Wd * 2 * itemsize      # 2 buffers x (in + out) per row
    tm = max(8, min(4096, ((vmem_budget // per_row_bytes) // 8) * 8))
    # Guarantee >= 2 grid steps so v7x's two TensorCores both get work.
    if Mrows > 8 and _cdiv(Mrows, tm) < 2:
        tm = min(tm, _round_up(_cdiv(Mrows, 2), 8))

    grid = (_cdiv(Mrows, tm),)                 # ragged last block: OOB writes dropped
    cparams = pltpu.CompilerParams(dimension_semantics=("parallel",))
    out_sds = jax.ShapeDtypeStruct((Mrows, Wd), dtype)

    if use_packed:
        gk = jnp.arange(Wd) // C
        pm = jnp.where(gk[:, None] == gk[None, :], 1.0 / C, 0.0).astype(jnp.float32)
        out = pl.pallas_call(
            partial(_ln_grouped_kernel, eps=float(eps)),
            grid=grid,
            in_specs=[
                pl.BlockSpec((tm, Wd), lambda i: (i, 0)),
                pl.BlockSpec((Wd, Wd), lambda i: (0, 0)),   # grid-invariant
                pl.BlockSpec((1, Wd), lambda i: (0, 0)),
                pl.BlockSpec((1, Wd), lambda i: (0, 0)),
            ],
            out_specs=pl.BlockSpec((tm, Wd), lambda i: (i, 0)),
            out_shape=out_sds,
            compiler_params=cparams,
        )(xk, pm, w_k, b_k)
    else:
        out = pl.pallas_call(
            partial(_ln_rows_kernel, eps=float(eps), inv_c=1.0 / C),
            grid=grid,
            in_specs=[
                pl.BlockSpec((tm, Wd), lambda i: (i, 0)),
                pl.BlockSpec((1, Wd), lambda i: (0, 0)),
                pl.BlockSpec((1, Wd), lambda i: (0, 0)),
            ],
            out_specs=pl.BlockSpec((tm, Wd), lambda i: (i, 0)),
            out_shape=out_sds,
            compiler_params=cparams,
        )(xk, w_k, b_k)

    return out.reshape(orig_shape)
    # TODO(synk): in the full PanMamba network this LN should be fused into the
    # consumer GEMM (mamba in_proj / x_proj) to avoid one HBM round trip.


# ---------------------------------------------------------------------------
# Reference + self-test
# ---------------------------------------------------------------------------

def _reference_ln(x, w, b, eps=1e-5):
    x = x.astype(jnp.float32)
    mu = jnp.mean(x, axis=-1, keepdims=True)
    var = jnp.mean((x - mu) ** 2, axis=-1, keepdims=True)   # unbiased=False
    return (x - mu) / jnp.sqrt(var + eps) * w.astype(jnp.float32) + b.astype(jnp.float32)


if __name__ == "__main__":
    key = jax.random.PRNGKey(0)
    k1, k2, k3, k4, k5 = jax.random.split(key, 5)

    # 1) Packed lane-dense path, f32: token layout (B, H*W, C) with C = 32.
    B, H, W, C = 2, 16, 16, 32
    x = jax.random.normal(k1, (B, H * W, C), jnp.float32)
    weight = 1.0 + 0.1 * jax.random.normal(k2, (C,), jnp.float32)
    bias = 0.1 * jax.random.normal(k3, (C,), jnp.float32)
    y = jax.block_until_ready(layernorm_withbias(x, weight, bias))
    assert y.shape == x.shape and y.dtype == x.dtype
    err = float(jnp.max(jnp.abs(y - _reference_ln(x, weight, bias))))
    assert err < 3e-3, err

    # 2) Packed path with bf16 activations (kernel-side up/downcast).
    xb = jax.random.normal(k4, (2, 64, C), jnp.float32).astype(jnp.bfloat16)
    yb = jax.block_until_ready(layernorm_withbias(xb, weight, bias))
    assert yb.dtype == jnp.bfloat16
    errb = float(jnp.max(jnp.abs(yb.astype(jnp.float32) - _reference_ln(xb, weight, bias))))
    assert errb < 6e-2, errb

    # 3) Generic row path + ragged last grid block (no jnp.pad copy): C = 48, M = 100.
    C2 = 48
    x2 = jax.random.normal(k5, (2, 50, C2), jnp.float32)
    w2 = jnp.ones((C2,), jnp.float32)
    b2 = jnp.zeros((C2,), jnp.float32)
    y2 = jax.block_until_ready(layernorm_withbias(x2, w2, b2))
    err2 = float(jnp.max(jnp.abs(y2 - _reference_ln(x2, w2, b2))))
    assert err2 < 3e-3, err2

    print("KERNEL_OK")
</pallas_src>

<mosaic_0001>
module attributes {stable_mosaic.version = 11 : i64} {
  func.func @_ln_grouped_kernel(%arg0: i32, %arg1: memref<64x128xf32, #tpu.memory_space<vmem>>, %arg2: memref<128x128xf32, #tpu.memory_space<vmem>>, %arg3: memref<1x128xf32, #tpu.memory_space<vmem>>, %arg4: memref<1x128xf32, #tpu.memory_space<vmem>>, %arg5: memref<64x128xf32, #tpu.memory_space<vmem>>) attributes {dimension_semantics = [#tpu.dimension_semantics<parallel>], iteration_bounds = array<i64: 2>, scalar_prefetch = 0 : i64, scratch_operands = 0 : i64, tpu.core_type = #tpu.core_type<tc>, window_params = [{transform_indices = @transform_0, window_bounds = array<i64: 64, 128>}, {pipeline_mode = #tpu.pipeline_mode<synchronous>, transform_indices = @transform_1, window_bounds = array<i64: 128, 128>}, {pipeline_mode = #tpu.pipeline_mode<synchronous>, transform_indices = @transform_2, window_bounds = array<i64: 1, 128>}, {pipeline_mode = #tpu.pipeline_mode<synchronous>, transform_indices = @transform_3, window_bounds = array<i64: 1, 128>}, {transform_indices = @transform_4, window_bounds = array<i64: 64, 128>}]} {
    %c0 = arith.constant 0 : index
    %c0_0 = arith.constant 0 : index
    %0 = vector.load %arg1[%c0, %c0_0] : memref<64x128xf32, #tpu.memory_space<vmem>>, vector<64x128xf32>
    %c0_1 = arith.constant 0 : index
    %c0_2 = arith.constant 0 : index
    %1 = vector.load %arg2[%c0_1, %c0_2] : memref<128x128xf32, #tpu.memory_space<vmem>>, vector<128x128xf32>
    %c0_3 = arith.constant 0 : index
    %c0_4 = arith.constant 0 : index
    %2 = vector.load %arg3[%c0_3, %c0_4] : memref<1x128xf32, #tpu.memory_space<vmem>>, vector<1x128xf32>
    %c0_5 = arith.constant 0 : index
    %c0_6 = arith.constant 0 : index
    %3 = vector.load %arg4[%c0_5, %c0_6] : memref<1x128xf32, #tpu.memory_space<vmem>>, vector<1x128xf32>
    %cst = arith.constant dense<0.000000e+00> : vector<64x128xf32>
    %4 = tpu.matmul %0, %1, %cst {dimension_numbers = #tpu.dot_dimension_numbers<[1], [0], [0], [1], [0, 0, 1, 1], [], []>} : vector<64x128xf32>, vector<128x128xf32>, vector<64x128xf32> -> vector<64x128xf32>
    %5 = arith.subf %0, %4 : vector<64x128xf32>
    %6 = arith.mulf %5, %5 : vector<64x128xf32>
    %cst_7 = arith.constant dense<0.000000e+00> : vector<64x128xf32>
    %7 = tpu.matmul %6, %1, %cst_7 {dimension_numbers = #tpu.dot_dimension_numbers<[1], [0], [0], [1], [0, 0, 1, 1], [], []>} : vector<64x128xf32>, vector<128x128xf32>, vector<64x128xf32> -> vector<64x128xf32>
    %cst_8 = arith.constant 9.99999974E-6 : f32
    %8 = vector.broadcast %cst_8 : f32 to vector<64x128xf32>
    %9 = arith.addf %7, %8 : vector<64x128xf32>
    %10 = math.rsqrt %9 : vector<64x128xf32>
    %11 = arith.mulf %5, %10 : vector<64x128xf32>
    %12 = vector.broadcast %2 : vector<1x128xf32> to vector<64x128xf32>
    %13 = arith.mulf %11, %12 : vector<64x128xf32>
    %14 = vector.broadcast %3 : vector<1x128xf32> to vector<64x128xf32>
    %15 = arith.addf %13, %14 : vector<64x128xf32>
    %c0_9 = arith.constant 0 : index
    %c0_10 = arith.constant 0 : index
    %16 = vector.load %arg5[%c0_9, %c0_10] : memref<64x128xf32, #tpu.memory_space<vmem>>, vector<64x128xf32>
    tpu.vector_store %arg5[%c0_9, %c0_10], %15 {strides = array<i32>} : memref<64x128xf32, #tpu.memory_space<vmem>>, vector<64x128xf32>,
    return
  }
  func.func @transform_0(%arg0: i32) -> (i32, i32) {
    %c0_i32 = arith.constant 0 : i32
    %c0_i32_0 = arith.constant 0 : i32
    return %arg0, %c0_i32 : i32, i32
  }
  func.func @transform_1(%arg0: i32) -> (i32, i32) {
    %c0_i32 = arith.constant 0 : i32
    %c0_i32_0 = arith.constant 0 : i32
    %c0_i32_1 = arith.constant 0 : i32
    return %c0_i32, %c0_i32_0 : i32, i32
  }
  func.func @transform_2(%arg0: i32) -> (i32, i32) {
    %c0_i32 = arith.constant 0 : i32
    %c0_i32_0 = arith.constant 0 : i32
    %c0_i32_1 = arith.constant 0 : i32
    return %c0_i32, %c0_i32_0 : i32, i32
  }
  func.func @transform_3(%arg0: i32) -> (i32, i32) {
    %c0_i32 = arith.constant 0 : i32
    %c0_i32_0 = arith.constant 0 : i32
    %c0_i32_1 = arith.constant 0 : i32
    return %c0_i32, %c0_i32_0 : i32, i32
  }
  func.func @transform_4(%arg0: i32) -> (i32, i32) {
    %c0_i32 = arith.constant 0 : i32
    %c0_i32_0 = arith.constant 0 : i32
    return %arg0, %c0_i32 : i32, i32
  }
}

</mosaic_0001>

<llo_original>
// kernel: layernorm_withbias.1
$region0: #{layernorm_withbias.1}
  #allocation0 [shape = 'u32[]', space=smem, size = 0x4, offset = 0x4, fixed_abs, tag = 'smem constant byte address 0x4 - core index']
  #allocation1 [shape = 'u32[144,128]{1,0:T(1,128)}', space=vmem, size = 0x12000, scoped, tag = 'internal scratch']
  %s0 = inlined_call_operand.vmem [shape: f32[128,128], index: 0, kind: input, shape index: {}]
  %s1 = inlined_call_operand.vmem [shape: f32[128,128], index: 1, kind: input, shape index: {}]
  %s2 = inlined_call_operand.vmem [shape: f32[1,128], index: 2, kind: input, shape index: {}]
  %s3 = inlined_call_operand.vmem [shape: f32[1,128], index: 3, kind: input, shape index: {}]
  %s4 = inlined_call_operand.vmem [shape: f32[128,128], index: 4, kind: output, shape index: {}]
  %s5 = sld [smem:[#allocation0]]
  $region49: #{layernorm_withbias.1} parent=0
    _
  %s7 = ssub.s32 1, %s5
  %s8 = scalar_select 0, %s7, %s5
  loop: start=0, step=1, limit=4
  $region2: #{layernorm_withbias.1} parent=0 // loop_pre_header
    _
  $region3: #{layernorm_withbias.1} parent=0 // loop_header
    %s10 = sphi 0, %s14
    %p11 = scmp.ge.s32.totalorder %s10, 4
    %s20 = sphi 0, %s22
    %s23 = sphi 0, %s20
    %s24 = sphi 0, %s23
    %s40 = sphi 0, %s24
    %s44 = sphi 0, %s44
    %s46 = sphi 0, %s44
    %s47 = sphi 0, %s46
    %s61 = sphi 0, %s47
    %s65 = sphi 0, %s65
    %s67 = sphi 0, %s65
    %s68 = sphi 0, %s67
    %s82 = sphi 0, %s68
    %s86 = sphi 0, %s86
    %s88 = sphi 0, %s86
    %s89 = sphi 0, %s88
    %s103 = sphi 0, %s89
    %s109 = sphi 0, %s111
    %s112 = sphi 0, %s109
    %s113 = sphi 0, %s112
    %s129 = sphi 0, %s113
  $region4: #{layernorm_withbias.1} parent=0 // loop_header_branch
    %13 = sbr.rel (%p11) target = $region8
  $region5: #{layernorm_withbias.1} parent=0 // loop_body
    %s15 = ssub.s32 %s10, 1
    %s16 = ssub.s32 %s10, 2
    %s17 = sadd.s32 %s10, 1
    %s18 = ssub.s32 %s10, %s17
    %p19 = scmp.eq.s32.totalorder %s18, 0
    %s21 = sadd.s32 %s20, 1
    %s22 = scalar_select %p19, %s20, %s21
    %p25 = pneg %p19
    %p26 = scmp.eq.s32.totalorder %s10, 1
    %p27 = por %p25, %p26
    %p28 = scmp.ne.s32.totalorder %s20, %s23
    %p29 = scmp.eq.s32.totalorder %s10, 0
    %p30 = por %p28, %p29
    %p31 = scmp.ne.s32.totalorder %s20, %s23
    %p32 = scmp.eq.s32.totalorder %s15, 1
    %p33 = por %p31, %p32
    %p34 = scmp.ne.s32.totalorder %s23, %s24
    %p35 = scmp.eq.s32.totalorder %s15, 0
    %p36 = por %p34, %p35
    %p37 = scmp.ne.s32.totalorder %s23, %s24
    %p38 = scmp.eq.s32.totalorder %s16, 1
    %p39 = por %p37, %p38
    %p41 = scmp.ne.s32.totalorder %s24, %s40
    %p42 = scmp.eq.s32.totalorder %s16, 0
    %p43 = por %p41, %p42
    %s45 = sadd.s32 %s44, 1
    %p48 = scmp.eq.s32.totalorder %s10, 1
    %p49 = scmp.ne.s32.totalorder %s44, %s46
    %p50 = scmp.eq.s32.totalorder %s10, 0
    %p51 = por %p49, %p50
    %p52 = scmp.ne.s32.totalorder %s44, %s46
    %p53 = scmp.eq.s32.totalorder %s15, 1
    %p54 = por %p52, %p53
    %p55 = scmp.ne.s32.totalorder %s46, %s47
    %p56 = scmp.eq.s32.totalorder %s15, 0
    %p57 = por %p55, %p56
    %p58 = scmp.ne.s32.totalorder %s46, %s47
    %p59 = scmp.eq.s32.totalorder %s16, 1
    %p60 = por %p58, %p59
    %p62 = scmp.ne.s32.totalorder %s47, %s61
    %p63 = scmp.eq.s32.totalorder %s16, 0
    %p64 = por %p62, %p63
    %s66 = sadd.s32 %s65, 1
    %p69 = scmp.eq.s32.totalorder %s10, 1
    %p70 = scmp.ne.s32.totalorder %s65, %s67
    %p71 = scmp.eq.s32.totalorder %s10, 0
    %p72 = por %p70, %p71
    %p73 = scmp.ne.s32.totalorder %s65, %s67
    %p74 = scmp.eq.s32.totalorder %s15, 1
    %p75 = por %p73, %p74
    %p76 = scmp.ne.s32.totalorder %s67, %s68
    %p77 = scmp.eq.s32.totalorder %s15, 0
    %p78 = por %p76, %p77
    %p79 = scmp.ne.s32.totalorder %s67, %s68
    %p80 = scmp.eq.s32.totalorder %s16, 1
    %p81 = por %p79, %p80
    %p83 = scmp.ne.s32.totalorder %s68, %s82
    %p84 = scmp.eq.s32.totalorder %s16, 0
    %p85 = por %p83, %p84
    %s87 = sadd.s32 %s86, 1
    %p90 = scmp.eq.s32.totalorder %s10, 1
    %p91 = scmp.ne.s32.totalorder %s86, %s88
    %p92 = scmp.eq.s32.totalorder %s10, 0
    %p93 = por %p91, %p92
    %p94 = scmp.ne.s32.totalorder %s86, %s88
    %p95 = scmp.eq.s32.totalorder %s15, 1
    %p96 = por %p94, %p95
    %p97 = scmp.ne.s32.totalorder %s88, %s89
    %p98 = scmp.eq.s32.totalorder %s15, 0
    %p99 = por %p97, %p98
    %p100 = scmp.ne.s32.totalorder %s88, %s89
    %p101 = scmp.eq.s32.totalorder %s16, 1
    %p102 = por %p100, %p101
    %p104 = scmp.ne.s32.totalorder %s89, %s103
    %p105 = scmp.eq.s32.totalorder %s16, 0
    %p106 = por %p104, %p105
    %s107 = ssub.s32 %s10, %s17
    %p108 = scmp.eq.s32.totalorder %s107, 0
    %s110 = sadd.s32 %s109, 1
    %s111 = scalar_select %p108, %s109, %s110
    %p114 = pneg %p108
    %p115 = scmp.eq.s32.totalorder %s10, 1
    %p116 = por %p114, %p115
    %p117 = scmp.ne.s32.totalorder %s109, %s112
    %p118 = scmp.eq.s32.totalorder %s10, 0
    %p119 = por %p117, %p118
    %p120 = scmp.ne.s32.totalorder %s109, %s112
    %p121 = scmp.eq.s32.totalorder %s15, 1
    %p122 = por %p120, %p121
    %p123 = scmp.ne.s32.totalorder %s112, %s113
    %p124 = scmp.eq.s32.totalorder %s15, 0
    %p125 = por %p123, %p124
    %p126 = scmp.ne.s32.totalorder %s112, %s113
    %p127 = scmp.eq.s32.totalorder %s16, 1
    %p128 = por %p126, %p127
    %p130 = scmp.ne.s32.totalorder %s113, %s129
    %p131 = scmp.eq.s32.totalorder %s16, 0
    %p132 = por %p130, %p131
    %p133 = scmp.le.s32.totalorder 1, %s10
    %p134 = scmp.lt.s32.totalorder %s10, 3
    %p135 = pnand %p133, %p134
    %p136 = pneg %p135
    // Predicated region
    $region9: #{layernorm_withbias.1} parent=5 // pred_check
      _
    $region10: #{layernorm_withbias.1} parent=5 // pred_check_branch
      %138 = sbr.rel (%p135) target = $region12
    $region11: #{layernorm_withbias.1} parent=5 // pred_region
      %s139 = ssub.s32 %s10, 1
      // Predicated region
      $region13: #{layernorm_withbias.1} parent=11 // pred_check
        %p140 = pneg %p57
      $region14: #{layernorm_withbias.1} parent=11 // pred_check_branch
        %142 = sbr.rel (%p140) target = $region16
      $region15: #{layernorm_withbias.1} parent=11 // pred_region
        _
      $region16: #{layernorm_withbias.1} parent=11 // pred_fallthru
        _
      // Predicated region
      $region17: #{layernorm_withbias.1} parent=11 // pred_check
        %p143 = pneg %p78
      $region18: #{layernorm_withbias.1} parent=11 // pred_check_branch
        %145 = sbr.rel (%p143) target = $region20
      $region19: #{layernorm_withbias.1} parent=11 // pred_region
        _
      $region20: #{layernorm_withbias.1} parent=11 // pred_fallthru
        _
      // Predicated region
      $region21: #{layernorm_withbias.1} parent=11 // pred_check
        %p146 = pneg %p99
      $region22: #{layernorm_withbias.1} parent=11 // pred_check_branch
        %148 = sbr.rel (%p146) target = $region24
      $region23: #{layernorm_withbias.1} parent=11 // pred_region
        _
      $region24: #{layernorm_withbias.1} parent=11 // pred_fallthru
        _
    $region12: #{layernorm_withbias.1} parent=5 // pred_fallthru
      _
    %p149 = scmp.lt.s32.totalorder %s10, 2
    // Predicated region
    $region25: #{layernorm_withbias.1} parent=5 // pred_check
      %p150 = pneg %p149
    $region26: #{layernorm_withbias.1} parent=5 // pred_check_branch
      %152 = sbr.rel (%p150) target = $region28
    $region27: #{layernorm_withbias.1} parent=5 // pred_region
      // Predicated region
      $region29: #{layernorm_withbias.1} parent=27 // pred_check
        %p153 = pneg %p30
      $region30: #{layernorm_withbias.1} parent=27 // pred_check_branch
        %155 = sbr.rel (%p153) target = $region32
      $region31: #{layernorm_withbias.1} parent=27 // pred_region
        %s156 = smul.u32 8, %s10
        %p157 = scmp.lt.s32.totalorder %s156, 15
        %s158 = scalar_select %p157, %s156, 15
        %s159 = smul.addr %s158, 8
        %s160 = scalar_lea.vmem %s0, %s159
        %s161 = smul.u32 8, %s10
      $region32: #{layernorm_withbias.1} parent=27 // pred_fallthru
        _
    $region28: #{layernorm_withbias.1} parent=5 // pred_fallthru
      _
    %p162 = scmp.le.s32.totalorder 1, %s10
    %p163 = scmp.lt.s32.totalorder %s10, 3
    %p164 = pnand %p162, %p163
    %p165 = pneg %p164
    // Predicated region
    $region33: #{layernorm_withbias.1} parent=5 // pred_check
      _
    $region34: #{layernorm_withbias.1} parent=5 // pred_check_branch
      %167 = sbr.rel (%p164) target = $region36
    $region35: #{layernorm_withbias.1} parent=5 // pred_region
      %s168 = ssub.s32 %s10, 1
      %s169 = smul.u32 8, %s15
      %p170 = scmp.lt.s32.totalorder %s169, 15
      %s171 = scalar_select %p170, %s169, 15
      %s172 = smul.addr %s171, 8
      %s173 = scalar_lea.vmem %s0, %s172
      %p174 = pneg %p36
      %p175 = pneg %p33
      %p176 = pneg %p57
      %p177 = pneg %p54
      %p178 = pneg %p78
      %p179 = pneg %p75
      %p180 = pneg %p99
      %p181 = pneg %p96
      %p182 = pneg %p125
      %p183 = pneg %p122
      %s184 = smul.u32 8, %s15
      %p185 = scmp.lt.s32.totalorder %s184, 15
      %s186 = scalar_select %p185, %s184, 15
      %s187 = smul.addr %s186, 8
      %s188 = scalar_lea.vmem %s4, %s187
      %s189 = smul.u32 8, %s15
      %p190 = scmp.lt.s32.totalorder %s189, 15
      %s191 = scalar_select %p190, %s189, 15
      %s192 = smul.addr %s191, 8
      %s193 = scalar_lea.vmem %s0, %s192
      %s194 = smul.u32 8, %s15
      %s195 = smul.u32 8, %s15
      %p196 = scmp.lt.s32.totalorder %s195, 15
      %s197 = scalar_select %p196, %s195, 15
      %s198 = smul.addr %s197, 8
      %s199 = scalar_lea.vmem %s4, %s198
      %s200 = smul.u32 8, %s15
      %v201 = vld [vmem:[%s193] sm:$0xff]
      %v202 = vld [vmem:[%s193 + $0x8] sm:$0xff]
      %v203 = vld [vmem:[%s193 + $0x10] sm:$0xff]
      %v204 = vld [vmem:[%s193 + $0x18] sm:$0xff]
      %v205 = vld [vmem:[%s193 + $0x20] sm:$0xff]
      %v206 = vld [vmem:[%s193 + $0x28] sm:$0xff]
      %v207 = vld [vmem:[%s193 + $0x30] sm:$0xff]
      %v208 = vld [vmem:[%s193 + $0x38] sm:$0xff]
      %v209 = vld [vmem:[%s1] sm:$0xff]
      %v210 = vld [vmem:[%s1 + $0x8] sm:$0xff]
      %v211 = vld [vmem:[%s1 + $0x10] sm:$0xff]
      %v212 = vld [vmem:[%s1 + $0x18] sm:$0xff]
      %v213 = vld [vmem:[%s1 + $0x20] sm:$0xff]
      %v214 = vld [vmem:[%s1 + $0x28] sm:$0xff]
      %v215 = vld [vmem:[%s1 + $0x30] sm:$0xff]
      %v216 = vld [vmem:[%s1 + $0x38] sm:$0xff]
      %v217 = vld [vmem:[%s1 + $0x40] sm:$0xff]
      %v218 = vld [vmem:[%s1 + $0x48] sm:$0xff]
      %v219 = vld [vmem:[%s1 + $0x50] sm:$0xff]
      %v220 = vld [vmem:[%s1 + $0x58] sm:$0xff]
      %v221 = vld [vmem:[%s1 + $0x60] sm:$0xff]
      %v222 = vld [vmem:[%s1 + $0x68] sm:$0xff]
      %v223 = vld [vmem:[%s1 + $0x70] sm:$0xff]
      %v224 = vld [vmem:[%s1 + $0x78] sm:$0xff]
      %v225 = vld [vmem:[%s2] sm:$0x1]
      %v226 = vld [vmem:[%s3] sm:$0x1]
      %227 = vmatprep.subr.mxu0 0.0
      %228 = vmatpush1.msra.mxu0 %v209
      %229 = vmatprep.subr.mxu0 0.0
      %230 = vmatpush1.msra.mxu0 %v210
      %231 = vmatprep.subr.mxu0 0.0
      %232 = vmatpush1.msra.mxu0 %v211
      %233 = vmatprep.subr.mxu0 0.0
      %234 = vmatpush1.msra.mxu0 %v212
      %235 = vmatprep.subr.mxu0 0.0
      %236 = vmatpush1.msra.mxu0 %v213
      %237 = vmatprep.subr.mxu0 0.0
      %238 = vmatpush1.msra.mxu0 %v214
      %239 = vmatprep.subr.mxu0 0.0
      %240 = vmatpush1.msra.mxu0 %v215
      %241 = vmatprep.subr.mxu0 0.0
      %242 = vmatpush1.msra.mxu0 %v216
      %243 = vmatprep.subr.mxu0 0.0
      %244 = vmatpush1.msra.mxu0 %v217
      %245 = vmatprep.subr.mxu0 0.0
      %246 = vmatpush1.msra.mxu0 %v218
      %247 = vmatprep.subr.mxu0 0.0
      %248 = vmatpush1.msra.mxu0 %v219
      %249 = vmatprep.subr.mxu0 0.0
      %250 = vmatpush1.msra.mxu0 %v220
      %251 = vmatprep.subr.mxu0 0.0
      %252 = vmatpush1.msra.mxu0 %v221
      %253 = vmatprep.subr.mxu0 0.0
      %254 = vmatpush1.msra.mxu0 %v222
      %255 = vmatprep.subr.mxu0 0.0
      %256 = vmatpush1.msra.mxu0 %v223
      %257 = vmatprep.subr.mxu0 0.0
      %258 = vmatpush1.msra.mxu0 %v224
      %259 = vmatprep.subr.mxu0 0.0
      %260 = vmatpush1.msra.mxu0 0.0
      %261 = vmatprep.subr.mxu0 0.0
      %262 = vmatpush1.msra.mxu0 0.0
      %263 = vmatprep.subr.mxu0 0.0
      %264 = vmatpush1.msra.mxu0 0.0
      %265 = vmatprep.subr.mxu0 0.0
      %266 = vmatpush1.msra.mxu0 0.0
      %267 = vmatprep.subr.mxu0 0.0
      %268 = vmatpush1.msra.mxu0 0.0
      %269 = vmatprep.subr.mxu0 0.0
      %270 = vmatpush1.msra.mxu0 0.0
      %271 = vmatprep.subr.mxu0 0.0
      %272 = vmatpush1.msra.mxu0 0.0
      %273 = vmatprep.subr.mxu0 0.0
      %274 = vmatpush1.msra.mxu0 0.0
      %275 = vmatprep.subr.mxu0 0.0
      %276 = vmatpush1.msra.mxu0 0.0
      %277 = vmatprep.subr.mxu0 0.0
      %278 = vmatpush1.msra.mxu0 0.0
      %279 = vmatprep.subr.mxu0 0.0
      %280 = vmatpush1.msra.mxu0 0.0
      %281 = vmatprep.subr.mxu0 0.0
      %282 = vmatpush1.msra.mxu0 0.0
      %283 = vmatprep.subr.mxu0 0.0
      %284 = vmatpush1.msra.mxu0 0.0
      %285 = vmatprep.subr.mxu0 0.0
      %286 = vmatpush1.msra.mxu0 0.0
      %287 = vmatprep.subr.mxu0 0.0
      %288 = vmatpush1.msra.mxu0 0.0
      %289 = vmatprep.subr.mxu0 0.0
      %290 = vmatpush1.msra.mxu0 0.0
      %291 = vmatprep.mubr.f32.mxu0 0.0
      %292 = vmatmul.mubr.f32.gmra.mrb[0].mxu0 %v201
      %v293 = vpop.f32.mrb[0].mxu0
      %v294 = vadd.f32 0.0, %v293
      %v295 = vpop.f32.mrb[0].mxu0
      %296 = vmatprep.mubr.f32.mxu0 0.0
      %297 = vmatmul.mubr.f32.gmra.mrb[0].mxu0 %v202
      %v298 = vpop.f32.mrb[0].mxu0
      %v299 = vadd.f32 0.0, %v298
      %v300 = vpop.f32.mrb[0].mxu0
      %301 = vmatprep.mubr.f32.mxu0 0.0
      %302 = vmatmul.mubr.f32.gmra.mrb[0].mxu0 %v203
      %v303 = vpop.f32.mrb[0].mxu0
      %v304 = vadd.f32 0.0, %v303
      %v305 = vpop.f32.mrb[0].mxu0
      %306 = vmatprep.mubr.f32.mxu0 0.0
      %307 = vmatmul.mubr.f32.gmra.mrb[0].mxu0 %v204
      %v308 = vpop.f32.mrb[0].mxu0
      %v309 = vadd.f32 0.0, %v308
      %v310 = vpop.f32.mrb[0].mxu0
      %311 = vmatprep.mubr.f32.mxu0 0.0
      %312 = vmatmul.mubr.f32.gmra.mrb[0].mxu0 %v205
      %v313 = vpop.f32.mrb[0].mxu0
      %v314 = vadd.f32 0.0, %v313
      %v315 = vpop.f32.mrb[0].mxu0
      %316 = vmatprep.mubr.f32.mxu0 0.0
      %317 = vmatmul.mubr.f32.gmra.mrb[0].mxu0 %v206
      %v318 = vpop.f32.mrb[0].mxu0
      %v319 = vadd.f32 0.0, %v318
      %v320 = vpop.f32.mrb[0].mxu0
      %321 = vmatprep.mubr.f32.mxu0 0.0
      %322 = vmatmul.mubr.f32.gmra.mrb[0].mxu0 %v207
      %v323 = vpop.f32.mrb[0].mxu0
      %v324 = vadd.f32 0.0, %v323
      %v325 = vpop.f32.mrb[0].mxu0
      %326 = vmatprep.mubr.f32.mxu0 0.0
      %327 = vmatmul.mubr.f32.gmra.mrb[0].mxu0 %v208
      %v328 = vpop.f32.mrb[0].mxu0
      %v329 = vadd.f32 0.0, %v328
      %v330 = vpop.f32.mrb[0].mxu0
      %331 = vdwg.mxu0
      %v332 = vsub.f32 %v201, %v294
      %v333 = vsub.f32 %v202, %v299
      %v334 = vsub.f32 %v203, %v304
      %v335 = vsub.f32 %v204, %v309
      %v336 = vsub.f32 %v205, %v314
      %v337 = vsub.f32 %v206, %v319
      %v338 = vsub.f32 %v207, %v324
      %v339 = vsub.f32 %v208, %v329
      %v340 = vmul.f32 %v332, %v332
      %v341 = vmul.f32 %v333, %v333
      %v342 = vmul.f32 %v334, %v334
      %v343 = vmul.f32 %v335, %v335
      %v344 = vmul.f32 %v336, %v336
      %v345 = vmul.f32 %v337, %v337
      %v346 = vmul.f32 %v338, %v338
      %v347 = vmul.f32 %v339, %v339
      %348 = vmatprep.subr.mxu0 0.0
      %349 = vmatpush1.msra.mxu0 %v209
      %350 = vmatprep.subr.mxu0 0.0
      %351 = vmatpush1.msra.mxu0 %v210
      %352 = vmatprep.subr.mxu0 0.0
      %353 = vmatpush1.msra.mxu0 %v211
      %354 = vmatprep.subr.mxu0 0.0
      %355 = vmatpush1.msra.mxu0 %v212
      %356 = vmatprep.subr.mxu0 0.0
      %357 = vmatpush1.msra.mxu0 %v213
      %358 = vmatprep.subr.mxu0 0.0
      %359 = vmatpush1.msra.mxu0 %v214
      %360 = vmatprep.subr.mxu0 0.0
      %361 = vmatpush1.msra.mxu0 %v215
      %362 = vmatprep.subr.mxu0 0.0
      %363 = vmatpush1.msra.mxu0 %v216
      %364 = vmatprep.subr.mxu0 0.0
      %365 = vmatpush1.msra.mxu0 %v217
      %366 = vmatprep.subr.mxu0 0.0
      %367 = vmatpush1.msra.mxu0 %v218
      %368 = vmatprep.subr.mxu0 0.0
      %369 = vmatpush1.msra.mxu0 %v219
      %370 = vmatprep.subr.mxu0 0.0
      %371 = vmatpush1.msra.mxu0 %v220
      %372 = vmatprep.subr.mxu0 0.0
      %373 = vmatpush1.msra.mxu0 %v221
      %374 = vmatprep.subr.mxu0 0.0
      %375 = vmatpush1.msra.mxu0 %v222
      %376 = vmatprep.subr.mxu0 0.0
      %377 = vmatpush1.msra.mxu0 %v223
      %378 = vmatprep.subr.mxu0 0.0
      %379 = vmatpush1.msra.mxu0 %v224
      %380 = vmatprep.subr.mxu0 0.0
      %381 = vmatpush1.msra.mxu0 0.0
      %382 = vmatprep.subr.mxu0 0.0
      %383 = vmatpush1.msra.mxu0 0.0
      %384 = vmatprep.subr.mxu0 0.0
      %385 = vmatpush1.msra.mxu0 0.0
      %386 = vmatprep.subr.mxu0 0.0
      %387 = vmatpush1.msra.mxu0 0.0
      %388 = vmatprep.subr.mxu0 0.0
      %389 = vmatpush1.msra.mxu0 0.0
      %390 = vmatprep.subr.mxu0 0.0
      %391 = vmatpush1.msra.mxu0 0.0
      %392 = vmatprep.subr.mxu0 0.0
      %393 = vmatpush1.msra.mxu0 0.0
      %394 = vmatprep.subr.mxu0 0.0
      %395 = vmatpush1.msra.mxu0 0.0
      %396 = vmatprep.subr.mxu0 0.0
      %397 = vmatpush1.msra.mxu0 0.0
      %398 = vmatprep.subr.mxu0 0.0
      %399 = vmatpush1.msra.mxu0 0.0
      %400 = vmatprep.subr.mxu0 0.0
      %401 = vmatpush1.msra.mxu0 0.0
      %402 = vmatprep.subr.mxu0 0.0
      %403 = vmatpush1.msra.mxu0 0.0
      %404 = vmatprep.subr.mxu0 0.0
      %405 = vmatpush1.msra.mxu0 0.0
      %406 = vmatprep.subr.mxu0 0.0
      %407 = vmatpush1.msra.mxu0 0.0
      %408 = vmatprep.subr.mxu0 0.0
      %409 = vmatpush1.msra.mxu0 0.0
      %410 = vmatprep.subr.mxu0 0.0
      %411 = vmatpush1.msra.mxu0 0.0
      %412 = vmatprep.mubr.f32.mxu0 0.0
      %413 = vmatmul.mubr.f32.gmra.mrb[0].mxu0 %v340
      %v414 = vpop.f32.mrb[0].mxu0
      %v415 = vadd.f32 1e-05, %v414
      %v416 = vpop.f32.mrb[0].mxu0
      %417 = vmatprep.mubr.f32.mxu0 0.0
      %418 = vmatmul.mubr.f32.gmra.mrb[0].mxu0 %v341
      %v419 = vpop.f32.mrb[0].mxu0
      %v420 = vadd.f32 1e-05, %v419
      %v421 = vpop.f32.mrb[0].mxu0
      %422 = vmatprep.mubr.f32.mxu0 0.0
      %423 = vmatmul.mubr.f32.gmra.mrb[0].mxu0 %v342
      %v424 = vpop.f32.mrb[0].mxu0
      %v425 = vadd.f32 1e-05, %v424
      %v426 = vpop.f32.mrb[0].mxu0
      %427 = vmatprep.mubr.f32.mxu0 0.0
      %428 = vmatmul.mubr.f32.gmra.mrb[0].mxu0 %v343
      %v429 = vpop.f32.mrb[0].mxu0
      %v430 = vadd.f32 1e-05, %v429
      %v431 = vpop.f32.mrb[0].mxu0
      %432 = vmatprep.mubr.f32.mxu0 0.0
      %433 = vmatmul.mubr.f32.gmra.mrb[0].mxu0 %v344
      %v434 = vpop.f32.mrb[0].mxu0
      %v435 = vadd.f32 1e-05, %v434
      %v436 = vpop.f32.mrb[0].mxu0
      %437 = vmatprep.mubr.f32.mxu0 0.0
      %438 = vmatmul.mubr.f32.gmra.mrb[0].mxu0 %v345
      %v439 = vpop.f32.mrb[0].mxu0
      %v440 = vadd.f32 1e-05, %v439
      %v441 = vpop.f32.mrb[0].mxu0
      %442 = vmatprep.mubr.f32.mxu0 0.0
      %443 = vmatmul.mubr.f32.gmra.mrb[0].mxu0 %v346
      %v444 = vpop.f32.mrb[0].mxu0
      %v445 = vadd.f32 1e-05, %v444
      %v446 = vpop.f32.mrb[0].mxu0
      %447 = vmatprep.mubr.f32.mxu0 0.0
      %448 = vmatmul.mubr.f32.gmra.mrb[0].mxu0 %v347
      %v449 = vpop.f32.mrb[0].mxu0
      %v450 = vadd.f32 1e-05, %v449
      %v451 = vpop.f32.mrb[0].mxu0
      %452 = vdwg.mxu0
      %v453 = vrsqrt.pop %v415
      %v454 = vrsqrt.pop %v420
      %v455 = vrsqrt.pop %v425
      %v456 = vrsqrt.pop %v430
      %v457 = vrsqrt.pop %v435
      %v458 = vrsqrt.pop %v440
      %v459 = vrsqrt.pop %v445
      %v460 = vrsqrt.pop %v450
      %v461 = vmul.f32 %v332, %v453
      %v462 = vmul.f32 %v333, %v454
      %v463 = vmul.f32 %v334, %v455
      %v464 = vmul.f32 %v335, %v456
      %v465 = vmul.f32 %v336, %v457
      %v466 = vmul.f32 %v337, %v458
      %v467 = vmul.f32 %v338, %v459
      %v468 = vmul.f32 %v339, %v460
      %v470 = vlaneseq
      %v471 = vshrl.u32 %v470, 7
      %v472 = vsub.s32 0, %v471
      %v473 = vrot.slane %v225, %v472
      %v475 = vmul.f32 %v461, %v473
      %v476 = vmul.f32 %v462, %v473
      %v477 = vmul.f32 %v463, %v473
      %v478 = vmul.f32 %v464, %v473
      %v479 = vmul.f32 %v465, %v473
      %v480 = vmul.f32 %v466, %v473
      %v481 = vmul.f32 %v467, %v473
      %v482 = vmul.f32 %v468, %v473
      %v484 = vlaneseq
      %v485 = vshrl.u32 %v484, 7
      %v486 = vsub.s32 0, %v485
      %v487 = vrot.slane %v226, %v486
      %v489 = vadd.f32 %v475, %v487
      %v490 = vadd.f32 %v476, %v487
      %v491 = vadd.f32 %v477, %v487
      %v492 = vadd.f32 %v478, %v487
      %v493 = vadd.f32 %v479, %v487
      %v494 = vadd.f32 %v480, %v487
      %v495 = vadd.f32 %v481, %v487
      %v496 = vadd.f32 %v482, %v487
      %497 = vst [vmem:[%s199] sm:$0xff] %v489
      %498 = vst [vmem:[%s199 + $0x8] sm:$0xff] %v490
      %499 = vst [vmem:[%s199 + $0x10] sm:$0xff] %v491
      %500 = vst [vmem:[%s199 + $0x18] sm:$0xff] %v492
      %501 = vst [vmem:[%s199 + $0x20] sm:$0xff] %v493
      %502 = vst [vmem:[%s199 + $0x28] sm:$0xff] %v494
      %503 = vst [vmem:[%s199 + $0x30] sm:$0xff] %v495
      %504 = vst [vmem:[%s199 + $0x38] sm:$0xff] %v496
      %s505 = smul.u32 8, %s15
      %p506 = scmp.lt.s32.totalorder %s505, 15
      %s507 = scalar_select %p506, %s505, 15
      %s508 = smul.addr %s507, 8
      %s509 = scalar_lea.vmem %s4, %s508
      // Predicated region
      $region37: #{layernorm_withbias.1} parent=35 // pred_check
        %p510 = pneg %p122
      $region38: #{layernorm_withbias.1} parent=35 // pred_check_branch
        %512 = sbr.rel (%p510) target = $region40
      $region39: #{layernorm_withbias.1} parent=35 // pred_region
        %s513 = smul.u32 8, %s15
      $region40: #{layernorm_withbias.1} parent=35 // pred_fallthru
        _
    $region36: #{layernorm_withbias.1} parent=5 // pred_fallthru
      _
    %p514 = scmp.le.s32.totalorder 2, %s10
    // Predicated region
    $region41: #{layernorm_withbias.1} parent=5 // pred_check
      %p515 = pneg %p514
    $region42: #{layernorm_withbias.1} parent=5 // pred_check_branch
      %517 = sbr.rel (%p515) target = $region44
    $region43: #{layernorm_withbias.1} parent=5 // pred_region
      %s518 = ssub.s32 %s10, 2
      // Predicated region
      $region45: #{layernorm_withbias.1} parent=43 // pred_check
        %p519 = pneg %p128
      $region46: #{layernorm_withbias.1} parent=43 // pred_check_branch
        %521 = sbr.rel (%p519) target = $region48
      $region47: #{layernorm_withbias.1} parent=43 // pred_region
        %s522 = smul.u32 8, %s16
        %p523 = scmp.lt.s32.totalorder %s522, 15
        %s524 = scalar_select %p523, %s522, 15
        %s525 = smul.addr %s524, 8
        %s526 = scalar_lea.vmem %s4, %s525
      $region48: #{layernorm_withbias.1} parent=43 // pred_fallthru
        _
    $region44: #{layernorm_withbias.1} parent=5 // pred_fallthru
      _
  $region6: #{layernorm_withbias.1} parent=0 // loop_footer
    %s14 = sadd.s32 1, %s10
  $region7: #{layernorm_withbias.1} parent=0 // loop_footer_branch
    %9 = sbr.rel target = $region3
  $region8: #{layernorm_withbias.1} parent=0 // loop_exit
    _

</llo_original>
